<compile_context>
chip_gen: v7x
topology: tpu7x:2x2x1
jax: 0.10.0
libtpu: 0.0.40
codegen_flags: <defaults>
</compile_context>

<pallas_src>
import functools

import jax
import jax.numpy as jnp
from jax.experimental import pallas as pl
from jax.experimental.pallas import tpu as pltpu

LANE = 128            # lane width: feature dims padded to this
SUB = 16              # bf16-friendly sublane granularity for row tiles
MiB = 1024 * 1024


def _round_up(x, m):
    return (x + m - 1) // m * m


def _vmem_capacity_bytes():
    """Physical per-core VMEM; conservative (v7x-sized) fallback if unqueryable."""
    try:
        info = pltpu.get_tpu_info()
        cap = getattr(info, "vmem_capacity_bytes", None)
        if cap:
            return int(cap)
    except Exception:
        pass
    return 64 * MiB


_VMEM_PHYS = _vmem_capacity_bytes()
# Leave headroom for compiler-internal scratch / semaphores / output buffers.
_VMEM_LIMIT = min((_VMEM_PHYS * 3) // 4, 96 * MiB)


def _choose_tiles(num_nodes):
    """Square (tm, tk) aggregation tiles; larger on 128 MiB parts, bounded on v7x.

    With K-tiling the VMEM working set is O(tm*tk + tk*f_out), independent of N.
    """
    n16 = _round_up(max(num_nodes, SUB), SUB)
    cap = 512 if _VMEM_PHYS <= 64 * MiB else 1024
    tm = min(cap, n16)
    n_pad = _round_up(n16, tm)
    tk = tm                      # tk == tm keeps n_pad divisibility trivial
    return n_pad, tm, tk


# ------------------- optional single-buffering of invariants ---------------- #

def _probe_single_buffering():
    """Check pipeline_mode=pl.Buffered(1) end-to-end with a tiny kernel."""
    if not hasattr(pl, "Buffered"):
        return False
    try:
        def _k(x_ref, o_ref):
            o_ref[...] = x_ref[...] + 1.0

        fn = pl.pallas_call(
            _k,
            out_shape=jax.ShapeDtypeStruct((8, 128), jnp.float32),
            grid=(1,),
            in_specs=[pl.BlockSpec((8, 128), lambda i: (0, 0),
                                   pipeline_mode=pl.Buffered(1))],
            out_specs=pl.BlockSpec((8, 128), lambda i: (0, 0)),
        )
        jax.block_until_ready(fn(jnp.zeros((8, 128), jnp.float32)))
        return True
    except Exception:
        return False


_BUFFERED1_OK = _probe_single_buffering()


def _invariant_spec(block_shape, index_map):
    """BlockSpec for a grid-invariant operand: single-buffered when supported."""
    if _BUFFERED1_OK:
        return pl.BlockSpec(block_shape, index_map, pipeline_mode=pl.Buffered(1))
    return pl.BlockSpec(block_shape, index_map)


# ----------------------------- Pallas kernels ------------------------------ #

def xw_kernel(x_ref, w_ref, o_ref):
    """Feature transform for one row strip: XW = X @ W (hoisted out of aggregation)."""
    o_ref[...] = jnp.dot(
        x_ref[...], w_ref[...], preferred_element_type=jnp.float32
    ).astype(o_ref.dtype)


def agg_hidden_kernel(a_ref, xw_ref, scale_ref, shift_ref, o_ref, acc_ref):
    """K-tiled hidden layer: relu( (A @ XW) * scale + shift' ), bias folded into shift'."""
    k = pl.program_id(1)

    @pl.when(k == 0)
    def _():
        acc_ref[...] = jnp.zeros_like(acc_ref)

    acc_ref[...] += jnp.dot(a_ref[...], xw_ref[...],
                            preferred_element_type=jnp.float32)

    @pl.when(k == pl.num_programs(1) - 1)
    def _():
        h = acc_ref[...] * scale_ref[...] + shift_ref[...]   # folded eval BN (+ conv bias)
        o_ref[...] = jnp.maximum(h, 0.0).astype(o_ref.dtype)  # ReLU


def agg_final_kernel(a_ref, xw_ref, b_ref, o_ref, acc_ref, *, valid_out):
    """K-tiled final layer: log_softmax(A @ XW + b) over the valid output lanes."""
    k = pl.program_id(1)

    @pl.when(k == 0)
    def _():
        acc_ref[...] = jnp.zeros_like(acc_ref)

    acc_ref[...] += jnp.dot(a_ref[...], xw_ref[...],
                            preferred_element_type=jnp.float32)

    @pl.when(k == pl.num_programs(1) - 1)
    def _():
        h = acc_ref[...] + b_ref[...]
        lane = jax.lax.broadcasted_iota(jnp.int32, h.shape, dimension=1)
        mask = lane < valid_out
        h = jnp.where(mask, h, -1e30)                        # padded lanes excluded
        m = jnp.max(h, axis=-1, keepdims=True)
        z = h - m
        e = jnp.where(mask, jnp.exp(z), 0.0)
        lse = jnp.log(jnp.sum(e, axis=-1, keepdims=True))
        o_ref[...] = z - lse                                 # LogSoftmax(dim=-1)


# ------------------------------ call wrappers ------------------------------ #

def _compiler_params(semantics):
    return pltpu.CompilerParams(
        dimension_semantics=semantics,
        vmem_limit_bytes=_VMEM_LIMIT,
    )


def linear_layer(x_pad, w_pad, *, tm):
    n_pad, f_in = x_pad.shape
    f_out = w_pad.shape[1]
    return pl.pallas_call(
        xw_kernel,
        out_shape=jax.ShapeDtypeStruct((n_pad, f_out), jnp.bfloat16),
        grid=(n_pad // tm,),
        in_specs=[
            pl.BlockSpec((tm, f_in), lambda i: (i, 0)),       # X row strip (pipelined)
            _invariant_spec((f_in, f_out), lambda i: (0, 0)),  # W resident, single-buffered
        ],
        out_specs=pl.BlockSpec((tm, f_out), lambda i: (i, 0)),
        compiler_params=_compiler_params(("parallel",)),
    )(x_pad, w_pad)


def gcn_hidden_layer(a_pad, xw_pad, scale_pad, shift_pad, *, tm, tk):
    n_pad = a_pad.shape[0]
    f_out = xw_pad.shape[1]
    return pl.pallas_call(
        agg_hidden_kernel,
        out_shape=jax.ShapeDtypeStruct((n_pad, f_out), jnp.bfloat16),
        grid=(n_pad // tm, n_pad // tk),
        in_specs=[
            pl.BlockSpec((tm, tk), lambda i, k: (i, k)),        # A_hat tile (streamed)
            pl.BlockSpec((tk, f_out), lambda i, k: (k, 0)),     # XW K-slab (streamed)
            _invariant_spec((1, f_out), lambda i, k: (0, 0)),   # bn scale
            _invariant_spec((1, f_out), lambda i, k: (0, 0)),   # bn shift (+ folded bias)
        ],
        out_specs=pl.BlockSpec((tm, f_out), lambda i, k: (i, 0)),
        scratch_shapes=[pltpu.VMEM((tm, f_out), jnp.float32)],
        compiler_params=_compiler_params(("parallel", "arbitrary")),
    )(a_pad, xw_pad, scale_pad, shift_pad)


def gcn_final_layer(a_pad, xw_pad, b_pad, *, valid_out, tm, tk):
    n_pad = a_pad.shape[0]
    f_out = xw_pad.shape[1]
    kernel = functools.partial(agg_final_kernel, valid_out=valid_out)
    return pl.pallas_call(
        kernel,
        out_shape=jax.ShapeDtypeStruct((n_pad, f_out), jnp.float32),
        grid=(n_pad // tm, n_pad // tk),
        in_specs=[
            pl.BlockSpec((tm, tk), lambda i, k: (i, k)),
            pl.BlockSpec((tk, f_out), lambda i, k: (k, 0)),
            _invariant_spec((1, f_out), lambda i, k: (0, 0)),   # bias
        ],
        out_specs=pl.BlockSpec((tm, f_out), lambda i, k: (i, 0)),
        scratch_shapes=[pltpu.VMEM((tm, f_out), jnp.float32)],
        compiler_params=_compiler_params(("parallel", "arbitrary")),
    )(a_pad, xw_pad, b_pad)


# ------------------------------ model (glue) ------------------------------- #

@functools.partial(jax.jit, static_argnames=("num_nodes", "n_pad"))
def build_a_hat_padded(edge_index, num_nodes, n_pad):
    """Padded bf16 A_hat = D^{-1/2}(A+I)D^{-1/2}; built ONCE per graph and reused.

    The padded matrix is built directly (scatter into padded zeros, single cast)
    so each forward pass does not re-run the O(N^2) construction.
    Note: duplicate edges are deduplicated by .at[].set (matches unweighted PyG).
    """
    src, dst = edge_index[0], edge_index[1]
    a = jnp.zeros((n_pad, n_pad), jnp.float32).at[dst, src].set(1.0)
    diag = jnp.arange(num_nodes)
    a = a.at[diag, diag].add(1.0)                        # add self-loops (valid nodes)
    deg = jnp.sum(a, axis=1)
    d_inv_sqrt = jnp.where(deg > 0.0, jax.lax.rsqrt(jnp.maximum(deg, 1e-12)), 0.0)
    a = a * d_inv_sqrt[:, None] * d_inv_sqrt[None, :]
    return a.astype(jnp.bfloat16)                        # bf16 halves HBM traffic


def normalized_adjacency(edge_index, num_nodes):
    """Unpadded f32 A_hat (for the pure-JAX reference)."""
    src, dst = edge_index[0], edge_index[1]
    a = jnp.zeros((num_nodes, num_nodes), jnp.float32).at[dst, src].set(1.0)
    a = a + jnp.eye(num_nodes, dtype=jnp.float32)
    deg = jnp.maximum(jnp.sum(a, axis=1), 1e-12)
    d_inv_sqrt = 1.0 / jnp.sqrt(deg)
    return a * d_inv_sqrt[:, None] * d_inv_sqrt[None, :]


def init_gcn_params(key, input_dim, hidden_dim, output_dim, num_layers):
    dims = [input_dim] + [hidden_dim] * (num_layers - 1) + [output_dim]
    convs, bns = [], []
    for i in range(num_layers):
        key, kw = jax.random.split(key)
        fan_in, fan_out = dims[i], dims[i + 1]
        limit = jnp.sqrt(6.0 / (fan_in + fan_out))            # glorot
        w = jax.random.uniform(kw, (fan_in, fan_out), jnp.float32, -limit, limit)
        b = jnp.zeros((1, fan_out), jnp.float32)
        convs.append((w, b))
    eps = 1e-5
    for _ in range(num_layers - 1):
        key, k1, k2, k3, k4 = jax.random.split(key, 5)
        gamma = 1.0 + 0.1 * jax.random.normal(k1, (1, hidden_dim), jnp.float32)
        beta = 0.1 * jax.random.normal(k2, (1, hidden_dim), jnp.float32)
        run_mean = 0.1 * jax.random.normal(k3, (1, hidden_dim), jnp.float32)
        run_var = 1.0 + 0.1 * jax.random.uniform(k4, (1, hidden_dim), jnp.float32)
        scale = gamma / jnp.sqrt(run_var + eps)               # fold eval-mode BN
        shift = beta - run_mean * scale
        bns.append((scale, shift))
    return tuple(convs), tuple(bns)


def _pad2(a, rows, cols, fill=0.0):
    r, c = a.shape
    return jnp.pad(a, ((0, rows - r), (0, cols - c)), constant_values=fill)


@functools.partial(jax.jit, static_argnames=("num_nodes", "output_dim", "tm", "tk"))
def gcn_forward(x, a_pad, convs, bns, num_nodes, output_dim, tm, tk):
    n_pad = a_pad.shape[0]

    f_in_pad = _round_up(x.shape[1], LANE)
    h = _pad2(x, n_pad, f_in_pad).astype(jnp.bfloat16)

    for (w, b), (scale, shift) in zip(convs[:-1], bns):
        fi, fo = w.shape
        fo_pad = _round_up(fo, LANE)
        w_p = _pad2(w, _round_up(fi, LANE), fo_pad).astype(jnp.bfloat16)
        s_p = _pad2(scale, 1, fo_pad, fill=1.0)
        # Fold conv bias into BN shift: (h + b)*scale + shift == h*scale + (shift + b*scale)
        t_p = _pad2(shift + b * scale, 1, fo_pad)
        xw = linear_layer(h, w_p, tm=tm)                      # X @ W once per layer
        h = gcn_hidden_layer(a_pad, xw, s_p, t_p, tm=tm, tk=tk)
        # dropout(p, training=False) == identity in eval mode

    w, b = convs[-1]
    fi, fo = w.shape
    fo_pad = _round_up(fo, LANE)
    w_p = _pad2(w, _round_up(fi, LANE), fo_pad).astype(jnp.bfloat16)
    b_p = _pad2(b, 1, fo_pad)
    xw = linear_layer(h, w_p, tm=tm)
    out = gcn_final_layer(a_pad, xw, b_p, valid_out=output_dim, tm=tm, tk=tk)
    return out[:num_nodes, :output_dim]


def gcn_reference(x, edge_index, convs, bns, num_nodes):
    """Pure-JAX f32 reference of the same eval-mode forward."""
    a_hat = normalized_adjacency(edge_index, num_nodes)
    h = x
    for (w, b), (scale, shift) in zip(convs[:-1], bns):
        h = jnp.maximum((a_hat @ (h @ w) + b) * scale + shift, 0.0)
    w, b = convs[-1]
    h = a_hat @ (h @ w) + b
    return jax.nn.log_softmax(h, axis=-1)


# ---------------------------------- main ----------------------------------- #

if __name__ == "__main__":
    num_nodes = 16
    input_dim, hidden_dim, output_dim, num_layers = 8, 32, 8, 3

    key = jax.random.PRNGKey(0)
    key, kx = jax.random.split(key)
    x = jax.random.normal(kx, (num_nodes, input_dim), jnp.float32)

    # deterministic ring graph, undirected (both directions per edge)
    src = jnp.arange(num_nodes, dtype=jnp.int32)
    dst = (src + 1) % num_nodes
    edge_index = jnp.stack(
        [jnp.concatenate([src, dst]), jnp.concatenate([dst, src])], axis=0
    )  # [2, 32]

    convs, bns = init_gcn_params(key, input_dim, hidden_dim, output_dim, num_layers)

    n_pad, tm, tk = _choose_tiles(num_nodes)
    # A_hat built once per graph (padded + bf16), reused across forward calls.
    a_pad = jax.block_until_ready(build_a_hat_padded(edge_index, num_nodes, n_pad))

    out = gcn_forward(x, a_pad, convs, bns,
                      num_nodes=num_nodes, output_dim=output_dim, tm=tm, tk=tk)
    out = jax.block_until_ready(out)

    assert out.shape == (num_nodes, output_dim)
    assert bool(jnp.all(jnp.isfinite(out)))
    # rows of log_softmax output must exp-sum to 1
    assert jnp.allclose(jnp.sum(jnp.exp(out), axis=-1), 1.0, atol=1e-4)
    # compare class probabilities against the f32 reference (bf16-tolerant)
    ref = gcn_reference(x, edge_index, convs, bns, num_nodes)
    assert jnp.allclose(jnp.exp(out), jnp.exp(ref), atol=1e-1)
    print("KERNEL_OK")
</pallas_src>

<mosaic_0001>
module attributes {stable_mosaic.version = 11 : i64} {
  func.func @_k(%arg0: i32, %arg1: memref<8x128xf32, #tpu.memory_space<vmem>>, %arg2: memref<8x128xf32, #tpu.memory_space<vmem>>) attributes {dimension_semantics = [#tpu.dimension_semantics<arbitrary>], iteration_bounds = array<i64: 1>, scalar_prefetch = 0 : i64, scratch_operands = 0 : i64, tpu.core_type = #tpu.core_type<tc>, window_params = [{pipeline_mode = #tpu.pipeline_mode<synchronous>, transform_indices = @transform_0, window_bounds = array<i64: 8, 128>}, {pipeline_mode = #tpu.pipeline_mode<synchronous>, transform_indices = @transform_1, window_bounds = array<i64: 8, 128>}]} {
    %c0 = arith.constant 0 : index
    %c0_0 = arith.constant 0 : index
    %0 = vector.load %arg1[%c0, %c0_0] : memref<8x128xf32, #tpu.memory_space<vmem>>, vector<8x128xf32>
    %cst = arith.constant 1.000000e+00 : f32
    %1 = vector.broadcast %cst : f32 to vector<8x128xf32>
    %2 = arith.addf %0, %1 : vector<8x128xf32>
    %c0_1 = arith.constant 0 : index
    %c0_2 = arith.constant 0 : index
    %3 = vector.load %arg2[%c0_1, %c0_2] : memref<8x128xf32, #tpu.memory_space<vmem>>, vector<8x128xf32>
    tpu.vector_store %arg2[%c0_1, %c0_2], %2 {strides = array<i32>} : memref<8x128xf32, #tpu.memory_space<vmem>>, vector<8x128xf32>,
    return
  }
  func.func @transform_0(%arg0: i32) -> (i32, i32) {
    %c0_i32 = arith.constant 0 : i32
    %c0_i32_0 = arith.constant 0 : i32
    %c0_i32_1 = arith.constant 0 : i32
    return %c0_i32, %c0_i32_0 : i32, i32
  }
  func.func @transform_1(%arg0: i32) -> (i32, i32) {
    %c0_i32 = arith.constant 0 : i32
    %c0_i32_0 = arith.constant 0 : i32
    %c0_i32_1 = arith.constant 0 : i32
    return %c0_i32, %c0_i32_0 : i32, i32
  }
}

module attributes {stable_mosaic.version = 11 : i64} {
  func.func private @main(%arg0: i32) attributes {dimension_semantics = [#tpu.dimension_semantics<core_parallel>], iteration_bounds = array<i64: 2>, tpu.core_type = #tpu.core_type<sc_scalar_subcore>, window_params = []} {
    return
  }
}

module attributes {stable_mosaic.version = 11 : i64} {
  func.func private @main(%arg0: i32) attributes {dimension_semantics = [#tpu.dimension_semantics<core_parallel>], iteration_bounds = array<i64: 2>, tpu.core_type = #tpu.core_type<sc_scalar_subcore>, window_params = []} {
    return
  }
}

</mosaic_0001>

<llo_original>
// kernel: tpu_custom_call.1
$region0: #{tpu_custom_call.1}
  #allocation0 [shape = 'u32[]', space=smem, size = 0x4, offset = 0x4, fixed_abs, tag = 'smem constant byte address 0x4 - core index']
  #allocation1 [shape = 'u32[144,128]{1,0:T(1,128)}', space=vmem, size = 0x12000, scoped, tag = 'internal scratch']
  %s0 = inlined_call_operand.hbm [shape: f32[8,128], index: 0, kind: input, shape index: {}]
  %s1 = inlined_call_operand.hbm [shape: f32[8,128], index: 1, kind: output, shape index: {}]
  %s2 = sld [smem:[#allocation0]]
  $region18: #{tpu_custom_call.1} parent=0
    _
  %s4 = ssub.s32 1, %s2
  %s5 = scalar_select 0, %s4, %s2
  $region1: #{tpu_custom_call.1} parent=0
    #allocation2 [shape = 'u8[4096]{0}', space=vmem, size = 0x1000, scoped, tag = 'input window, operand 0, single buffered']
    #allocation3 [shape = 's32[1]{0}', space=sflag, size = 0x4, scoped, tag = 'scoped memory for tpu_custom_call.1']
    #allocation4 [shape = 's32[1]{0}', space=sflag, size = 0x4, scoped, tag = 'scoped memory for tpu_custom_call.1']
    #allocation5 [shape = 'u8[4096]{0}', space=vmem, size = 0x1000, scoped, tag = 'output window, operand 0, single buffered']
    %6 = vsyncpa [#allocation3], 0
    %7 = vsyncpa [#allocation4], 0
    // Predicated region
    $region2: #{tpu_custom_call.1} parent=1 // pred_check
      _
    $region3: #{tpu_custom_call.1} parent=1 // pred_check_branch
      %9 = sbr.rel (0) target = $region5
    $region4: #{tpu_custom_call.1} parent=1 // pred_region
      %s11 = ssub.s32 128, 128
      %12 = vsyncadd [#allocation3], %s11
      %s14 = sshll.u32 [#allocation2], 4
      %s15 = int_to_ptr.vmem [resolvable:$true] %s14
      %17 = dma.hbm_to_vmem [thread:$0]  %s0, 128, %s15, [#allocation3]
    $region5: #{tpu_custom_call.1} parent=1 // pred_fallthru
      _
    // Predicated region
    $region6: #{tpu_custom_call.1} parent=1 // pred_check
      _
    $region7: #{tpu_custom_call.1} parent=1 // pred_check_branch
      %19 = sbr.rel (0) target = $region9
    $region8: #{tpu_custom_call.1} parent=1 // pred_region
      %20 = dma.done [#allocation3], 128
    $region9: #{tpu_custom_call.1} parent=1 // pred_fallthru
      _
    %v21 = vld [vmem:[#allocation2] sm:$0xff]
    %v22 = vadd.f32 %v21, 1.0
    %23 = vst [vmem:[#allocation5] sm:$0xff] %v22
    // Predicated region
    $region10: #{tpu_custom_call.1} parent=1 // pred_check
      _
    $region11: #{tpu_custom_call.1} parent=1 // pred_check_branch
      %25 = sbr.rel (0) target = $region13
    $region12: #{tpu_custom_call.1} parent=1 // pred_region
      %s27 = ssub.s32 128, 128
      %28 = vsyncadd [#allocation4], %s27
      %s30 = sshll.u32 [#allocation5], 4
      %s31 = int_to_ptr.vmem [resolvable:$true] %s30
      %33 = dma.vmem_to_hbm [thread:$0]  %s31, 128, %s1, [#allocation4]
    $region13: #{tpu_custom_call.1} parent=1 // pred_fallthru
      _
    // Predicated region
    $region14: #{tpu_custom_call.1} parent=1 // pred_check
      _
    $region15: #{tpu_custom_call.1} parent=1 // pred_check_branch
      %35 = sbr.rel (0) target = $region17
    $region16: #{tpu_custom_call.1} parent=1 // pred_region
      %36 = dma.done [#allocation4], 128
    $region17: #{tpu_custom_call.1} parent=1 // pred_fallthru
      _
    %37 = vsyncpa [#allocation3], 1
    %38 = vsyncpa [#allocation4], 1

</llo_original>
